<compile_context>
chip_gen: v7x
topology: tpu7x:2x2x1
jax: 0.10.0
libtpu: 0.0.40
codegen_flags: <defaults>
</compile_context>

<pallas_src>
import jax
import jax.numpy as jnp
from jax.experimental import pallas as pl
from jax.experimental.pallas import tpu as pltpu


def _round_up(n: int, m: int) -> int:
    return ((n + m - 1) // m) * m


def _lstm_cell_kernel(x_ref, h_ref, c_ref, wx_ref, wh_ref, b_ref, hc_ref):
    # x: (TB, I) bf16, h: (TB, Hp) bf16, c: (TB, Hp) f32
    # wx: (I, 4Hp) bf16, wh: (Hp, 4Hp) bf16, b: (1, 4Hp) f32
    # hc: (TB, 2Hp) f32 output slab = [h_new | c_new]
    Hp = c_ref.shape[1]

    # Two MXU matmuls into one f32 accumulator (replaces concat(x, h) @ W).
    gates = jnp.dot(x_ref[...], wx_ref[...], preferred_element_type=jnp.float32)
    gates = gates + jnp.dot(h_ref[...], wh_ref[...],
                            preferred_element_type=jnp.float32)
    gates = gates + b_ref[...]

    # torch.chunk order: [candidate, forget, input, output].
    # Hp % 128 == 0 -> every slice below is lane-tile aligned.
    cand = jnp.tanh(gates[:, 0 * Hp:1 * Hp])
    f_g = jax.nn.sigmoid(gates[:, 1 * Hp:2 * Hp])
    i_g = jax.nn.sigmoid(gates[:, 2 * Hp:3 * Hp])
    o_g = jax.nn.sigmoid(gates[:, 3 * Hp:4 * Hp])

    # f32 state update (keeps the VPU/EUP path in f32 — important on v5e).
    c_new = f_g * c_ref[...] + i_g * cand
    h_new = o_g * jnp.tanh(c_new)

    # Single lane-dense output slab, two 128-aligned unmasked stores.
    hc_ref[:, :Hp] = h_new.astype(hc_ref.dtype)
    hc_ref[:, Hp:] = c_new.astype(hc_ref.dtype)


def lstm_cell_pallas(x, hx, W, b):
    """One LSTM cell step (PyTorch LSTMCell semantics of the given module).

    Args:
      x:  (B, input_size) float32
      hx: tuple (h, c), each (B, hidden_size) float32, or None for zero init.
      W:  (input_size + hidden_size, 4*hidden_size) float32
          (transposed nn.Linear weight; rows [0:I] -> x, rows [I:] -> h;
           gate order along the 4H axis is [candidate, forget, input, output]).
      b:  (4*hidden_size,) float32

    Returns:
      (new_hidden_state, current_cell_state), each (B, hidden_size), dtype of x.
    """
    B, I = x.shape
    H = W.shape[1] // 4
    assert W.shape[0] == I + H, "W must be (input_size + hidden_size, 4*hidden_size)"

    if hx is None:
        h = jnp.zeros((B, H), dtype=x.dtype)
        c = jnp.zeros((B, H), dtype=x.dtype)
    else:
        h, c = hx

    Hp = _round_up(H, 128)            # lane-aligned hidden dim
    Bp0 = _round_up(B, 8)             # sublane-aligned batch
    TB = min(Bp0, 256)                # batch tile per grid step
    Bp = _round_up(Bp0, TB)

    # Split fused weight into x / h parts; pad each gate's column block H -> Hp
    # with zeros so padded columns contribute exactly zero and can be sliced off.
    def pad_gate_cols(w):
        r = w.shape[0]
        w4 = jnp.pad(w.reshape(r, 4, H), ((0, 0), (0, 0), (0, Hp - H)))
        return w4.reshape(r, 4 * Hp)

    wx = pad_gate_cols(W[:I, :]).astype(jnp.bfloat16)                        # (I, 4Hp)
    wh = jnp.pad(pad_gate_cols(W[I:, :]),
                 ((0, Hp - H), (0, 0))).astype(jnp.bfloat16)                 # (Hp, 4Hp)
    b2 = jnp.pad(b.reshape(4, H),
                 ((0, 0), (0, Hp - H))).reshape(1, 4 * Hp).astype(jnp.float32)

    xp = jnp.pad(x, ((0, Bp - B), (0, 0))).astype(jnp.bfloat16)              # (Bp, I)
    hp = jnp.pad(h, ((0, Bp - B), (0, Hp - H))).astype(jnp.bfloat16)         # (Bp, Hp)
    cp = jnp.pad(c, ((0, Bp - B), (0, Hp - H))).astype(jnp.float32)          # (Bp, Hp)

    grid = (Bp // TB,)

    hc = pl.pallas_call(
        _lstm_cell_kernel,
        out_shape=jax.ShapeDtypeStruct((Bp, 2 * Hp), jnp.float32),
        grid=grid,
        in_specs=[
            pl.BlockSpec((TB, I), lambda i: (i, 0)),
            pl.BlockSpec((TB, Hp), lambda i: (i, 0)),
            pl.BlockSpec((TB, Hp), lambda i: (i, 0)),
            pl.BlockSpec((I, 4 * Hp), lambda i: (0, 0)),      # weights resident
            pl.BlockSpec((Hp, 4 * Hp), lambda i: (0, 0)),     # across batch tiles
            pl.BlockSpec((1, 4 * Hp), lambda i: (0, 0)),
        ],
        out_specs=pl.BlockSpec((TB, 2 * Hp), lambda i: (i, 0)),
        compiler_params=pltpu.CompilerParams(
            dimension_semantics=("parallel",),
            vmem_limit_bytes=32 * 1024 * 1024,
        ),
    )(xp, hp, cp, wx, wh, b2)

    h_new = hc[:B, :H].astype(x.dtype)
    c_new = hc[:B, Hp:Hp + H].astype(x.dtype)
    return h_new, c_new


def _reference_f32(x, hx, W, b):
    """Pure-f32 JAX reference of the PyTorch module semantics."""
    B = x.shape[0]
    H = W.shape[1] // 4
    if hx is None:
        h = jnp.zeros((B, H), dtype=x.dtype)
        c = jnp.zeros((B, H), dtype=x.dtype)
    else:
        h, c = hx
    combined = jnp.concatenate([x, h], axis=1)
    gates = combined @ W + b
    cand, f, i, o = jnp.split(gates, 4, axis=1)
    c_new = jax.nn.sigmoid(f) * c + jax.nn.sigmoid(i) * jnp.tanh(cand)
    h_new = jax.nn.sigmoid(o) * jnp.tanh(c_new)
    return h_new, c_new


def _reference_matched(x, hx, W, b):
    """Reference mirroring the kernel numerics (bf16 matmul operands, f32 math)."""
    B, I = x.shape
    H = W.shape[1] // 4
    if hx is None:
        h = jnp.zeros((B, H), dtype=x.dtype)
        c = jnp.zeros((B, H), dtype=x.dtype)
    else:
        h, c = hx
    gates = (jnp.dot(x.astype(jnp.bfloat16), W[:I].astype(jnp.bfloat16),
                     preferred_element_type=jnp.float32)
             + jnp.dot(h.astype(jnp.bfloat16), W[I:].astype(jnp.bfloat16),
                       preferred_element_type=jnp.float32)
             + b.reshape(1, -1).astype(jnp.float32))
    cand, f, i, o = jnp.split(gates, 4, axis=1)
    c_new = jax.nn.sigmoid(f) * c.astype(jnp.float32) + jax.nn.sigmoid(i) * jnp.tanh(cand)
    h_new = jax.nn.sigmoid(o) * jnp.tanh(c_new)
    return h_new.astype(x.dtype), c_new.astype(x.dtype)


if __name__ == "__main__":
    batch = 2
    input_size = 16
    hidden_size = 32

    key = jax.random.PRNGKey(0)
    kx, kh, kc, kw, kb = jax.random.split(key, 5)

    x = jax.random.normal(kx, (batch, input_size), dtype=jnp.float32)
    h0 = jax.random.normal(kh, (batch, hidden_size), dtype=jnp.float32)
    c0 = jax.random.normal(kc, (batch, hidden_size), dtype=jnp.float32)

    # nn.Linear-style init U(-1/sqrt(fan_in), 1/sqrt(fan_in)).
    fan_in = input_size + hidden_size
    bound = 1.0 / jnp.sqrt(jnp.float32(fan_in))
    W = jax.random.uniform(kw, (fan_in, 4 * hidden_size),
                           minval=-bound, maxval=bound, dtype=jnp.float32)
    b = jax.random.uniform(kb, (4 * hidden_size,),
                           minval=-bound, maxval=bound, dtype=jnp.float32)

    h_new, c_new = lstm_cell_pallas(x, (h0, c0), W, b)
    jax.block_until_ready((h_new, c_new))

    # Tight check vs a reference with matching numerics (bf16 matmul, f32 math).
    h_m, c_m = _reference_matched(x, (h0, c0), W, b)
    assert jnp.allclose(h_new, h_m, atol=1e-3, rtol=1e-3), "mismatch vs matched ref (h)"
    assert jnp.allclose(c_new, c_m, atol=1e-3, rtol=1e-3), "mismatch vs matched ref (c)"

    # Loose check vs the pure-f32 PyTorch-semantics reference (bf16 MXU rounding).
    h_ref, c_ref = _reference_f32(x, (h0, c0), W, b)
    assert jnp.allclose(h_new, h_ref, atol=5e-2, rtol=5e-2), "mismatch vs f32 ref (h)"
    assert jnp.allclose(c_new, c_ref, atol=5e-2, rtol=5e-2), "mismatch vs f32 ref (c)"

    # Exercise the hx=None (zero-init) path like the PyTorch module.
    h_z, c_z = lstm_cell_pallas(x, None, W, b)
    jax.block_until_ready((h_z, c_z))
    h_zr, c_zr = _reference_f32(x, None, W, b)
    assert jnp.allclose(h_z, h_zr, atol=5e-2, rtol=5e-2)
    assert jnp.allclose(c_z, c_zr, atol=5e-2, rtol=5e-2)

    print("KERNEL_OK")
</pallas_src>

<mosaic_0001>
module attributes {stable_mosaic.version = 11 : i64} {
  func.func @_lstm_cell_kernel(%arg0: i32, %arg1: memref<8x16xbf16, #tpu.memory_space<vmem>>, %arg2: memref<8x128xbf16, #tpu.memory_space<vmem>>, %arg3: memref<8x128xf32, #tpu.memory_space<vmem>>, %arg4: memref<16x512xbf16, #tpu.memory_space<vmem>>, %arg5: memref<128x512xbf16, #tpu.memory_space<vmem>>, %arg6: memref<1x512xf32, #tpu.memory_space<vmem>>, %arg7: memref<8x256xf32, #tpu.memory_space<vmem>>) attributes {dimension_semantics = [#tpu.dimension_semantics<parallel>], iteration_bounds = array<i64: 1>, scalar_prefetch = 0 : i64, scratch_operands = 0 : i64, tpu.core_type = #tpu.core_type<tc>, window_params = [{transform_indices = @transform_0, window_bounds = array<i64: 8, 16>}, {transform_indices = @transform_1, window_bounds = array<i64: 8, 128>}, {transform_indices = @transform_2, window_bounds = array<i64: 8, 128>}, {pipeline_mode = #tpu.pipeline_mode<synchronous>, transform_indices = @transform_3, window_bounds = array<i64: 16, 512>}, {pipeline_mode = #tpu.pipeline_mode<synchronous>, transform_indices = @transform_4, window_bounds = array<i64: 128, 512>}, {pipeline_mode = #tpu.pipeline_mode<synchronous>, transform_indices = @transform_5, window_bounds = array<i64: 1, 512>}, {transform_indices = @transform_6, window_bounds = array<i64: 8, 256>}]} {
    %c0 = arith.constant 0 : index
    %c0_0 = arith.constant 0 : index
    %0 = vector.load %arg1[%c0, %c0_0] : memref<8x16xbf16, #tpu.memory_space<vmem>>, vector<8x16xbf16>
    %c0_1 = arith.constant 0 : index
    %c0_2 = arith.constant 0 : index
    %1 = vector.load %arg4[%c0_1, %c0_2] : memref<16x512xbf16, #tpu.memory_space<vmem>>, vector<16x512xbf16>
    %cst = arith.constant dense<0.000000e+00> : vector<8x512xf32>
    %2 = tpu.matmul %0, %1, %cst {dimension_numbers = #tpu.dot_dimension_numbers<[1], [0], [0], [1], [0, 0, 1, 1], [], []>} : vector<8x16xbf16>, vector<16x512xbf16>, vector<8x512xf32> -> vector<8x512xf32>
    %c0_3 = arith.constant 0 : index
    %c0_4 = arith.constant 0 : index
    %3 = vector.load %arg2[%c0_3, %c0_4] : memref<8x128xbf16, #tpu.memory_space<vmem>>, vector<8x128xbf16>
    %c0_5 = arith.constant 0 : index
    %c0_6 = arith.constant 0 : index
    %4 = vector.load %arg5[%c0_5, %c0_6] : memref<128x512xbf16, #tpu.memory_space<vmem>>, vector<128x512xbf16>
    %cst_7 = arith.constant dense<0.000000e+00> : vector<8x512xf32>
    %5 = tpu.matmul %3, %4, %cst_7 {dimension_numbers = #tpu.dot_dimension_numbers<[1], [0], [0], [1], [0, 0, 1, 1], [], []>} : vector<8x128xbf16>, vector<128x512xbf16>, vector<8x512xf32> -> vector<8x512xf32>
    %6 = arith.addf %2, %5 : vector<8x512xf32>
    %c0_8 = arith.constant 0 : index
    %c0_9 = arith.constant 0 : index
    %7 = vector.load %arg6[%c0_8, %c0_9] : memref<1x512xf32, #tpu.memory_space<vmem>>, vector<1x512xf32>
    %8 = vector.broadcast %7 : vector<1x512xf32> to vector<8x512xf32>
    %9 = arith.addf %6, %8 : vector<8x512xf32>
    %10 = vector.extract_strided_slice %9 {offsets = [0, 0], sizes = [8, 128], strides = [1, 1]} : vector<8x512xf32> to vector<8x128xf32>
    %11 = math.tanh %10 : vector<8x128xf32>
    %12 = vector.extract_strided_slice %9 {offsets = [0, 128], sizes = [8, 128], strides = [1, 1]} : vector<8x512xf32> to vector<8x128xf32>
    %13 = arith.negf %12 : vector<8x128xf32>
    %14 = math.exp %13 : vector<8x128xf32>
    %cst_10 = arith.constant 1.000000e+00 : f32
    %15 = vector.broadcast %cst_10 : f32 to vector<8x128xf32>
    %16 = arith.addf %15, %14 : vector<8x128xf32>
    %17 = arith.divf %15, %16 : vector<8x128xf32>
    %18 = vector.extract_strided_slice %9 {offsets = [0, 256], sizes = [8, 128], strides = [1, 1]} : vector<8x512xf32> to vector<8x128xf32>
    %19 = arith.negf %18 : vector<8x128xf32>
    %20 = math.exp %19 : vector<8x128xf32>
    %cst_11 = arith.constant 1.000000e+00 : f32
    %21 = vector.broadcast %cst_11 : f32 to vector<8x128xf32>
    %22 = arith.addf %21, %20 : vector<8x128xf32>
    %23 = arith.divf %21, %22 : vector<8x128xf32>
    %24 = vector.extract_strided_slice %9 {offsets = [0, 384], sizes = [8, 128], strides = [1, 1]} : vector<8x512xf32> to vector<8x128xf32>
    %25 = arith.negf %24 : vector<8x128xf32>
    %26 = math.exp %25 : vector<8x128xf32>
    %cst_12 = arith.constant 1.000000e+00 : f32
    %27 = vector.broadcast %cst_12 : f32 to vector<8x128xf32>
    %28 = arith.addf %27, %26 : vector<8x128xf32>
    %29 = arith.divf %27, %28 : vector<8x128xf32>
    %c0_13 = arith.constant 0 : index
    %c0_14 = arith.constant 0 : index
    %30 = vector.load %arg3[%c0_13, %c0_14] : memref<8x128xf32, #tpu.memory_space<vmem>>, vector<8x128xf32>
    %31 = arith.mulf %17, %30 : vector<8x128xf32>
    %32 = arith.mulf %23, %11 : vector<8x128xf32>
    %33 = arith.addf %31, %32 : vector<8x128xf32>
    %34 = math.tanh %33 : vector<8x128xf32>
    %35 = arith.mulf %29, %34 : vector<8x128xf32>
    %c0_15 = arith.constant 0 : index
    %c0_16 = arith.constant 0 : index
    %36 = vector.load %arg7[%c0_15, %c0_16] : memref<8x256xf32, #tpu.memory_space<vmem>>, vector<8x128xf32>
    tpu.vector_store %arg7[%c0_15, %c0_16], %35 {strides = array<i32>} : memref<8x256xf32, #tpu.memory_space<vmem>>, vector<8x128xf32>,
    %c0_17 = arith.constant 0 : index
    %c128 = arith.constant 128 : index
    %37 = vector.load %arg7[%c0_17, %c128] : memref<8x256xf32, #tpu.memory_space<vmem>>, vector<8x128xf32>
    tpu.vector_store %arg7[%c0_17, %c128], %33 {strides = array<i32>} : memref<8x256xf32, #tpu.memory_space<vmem>>, vector<8x128xf32>,
    return
  }
  func.func @transform_0(%arg0: i32) -> (i32, i32) {
    %c0_i32 = arith.constant 0 : i32
    %c0_i32_0 = arith.constant 0 : i32
    return %arg0, %c0_i32 : i32, i32
  }
  func.func @transform_1(%arg0: i32) -> (i32, i32) {
    %c0_i32 = arith.constant 0 : i32
    %c0_i32_0 = arith.constant 0 : i32
    return %arg0, %c0_i32 : i32, i32
  }
  func.func @transform_2(%arg0: i32) -> (i32, i32) {
    %c0_i32 = arith.constant 0 : i32
    %c0_i32_0 = arith.constant 0 : i32
    return %arg0, %c0_i32 : i32, i32
  }
  func.func @transform_3(%arg0: i32) -> (i32, i32) {
    %c0_i32 = arith.constant 0 : i32
    %c0_i32_0 = arith.constant 0 : i32
    %c0_i32_1 = arith.constant 0 : i32
    return %c0_i32, %c0_i32_0 : i32, i32
  }
  func.func @transform_4(%arg0: i32) -> (i32, i32) {
    %c0_i32 = arith.constant 0 : i32
    %c0_i32_0 = arith.constant 0 : i32
    %c0_i32_1 = arith.constant 0 : i32
    return %c0_i32, %c0_i32_0 : i32, i32
  }
  func.func @transform_5(%arg0: i32) -> (i32, i32) {
    %c0_i32 = arith.constant 0 : i32
    %c0_i32_0 = arith.constant 0 : i32
    %c0_i32_1 = arith.constant 0 : i32
    return %c0_i32, %c0_i32_0 : i32, i32
  }
  func.func @transform_6(%arg0: i32) -> (i32, i32) {
    %c0_i32 = arith.constant 0 : i32
    %c0_i32_0 = arith.constant 0 : i32
    return %arg0, %c0_i32 : i32, i32
  }
}

</mosaic_0001>

<llo_original>
// kernel: tpu_custom_call.1
$region0: #{tpu_custom_call.1}
  #allocation0 [shape = 'u32[]', space=smem, size = 0x4, offset = 0x4, fixed_abs, tag = 'smem constant byte address 0x4 - core index']
  #allocation1 [shape = 'u32[144,128]{1,0:T(1,128)}', space=vmem, size = 0x12000, scoped, tag = 'internal scratch']
  %s0 = inlined_call_operand.hbm [shape: bf16[8,16], index: 0, kind: input, shape index: {}]
  %s1 = inlined_call_operand.hbm [shape: bf16[8,128], index: 1, kind: input, shape index: {}]
  %s2 = inlined_call_operand.hbm [shape: f32[8,128], index: 2, kind: input, shape index: {}]
  %s3 = inlined_call_operand.hbm [shape: bf16[16,512], index: 3, kind: input, shape index: {}]
  %s4 = inlined_call_operand.hbm [shape: bf16[128,512], index: 4, kind: input, shape index: {}]
  %s5 = inlined_call_operand.vmem [shape: f32[1,512], index: 5, kind: input, shape index: {}]
  %s6 = inlined_call_operand.hbm [shape: f32[8,256], index: 6, kind: output, shape index: {}]
  %s7 = sld [smem:[#allocation0]]
  $region54: #{tpu_custom_call.1} parent=0
    _
  %s9 = ssub.s32 1, %s7
  %s10 = scalar_select 0, %s9, %s7
  $region1: #{tpu_custom_call.1} parent=0
    #allocation2 [shape = 'u8[2048]{0}', space=vmem, size = 0x800, scoped, tag = 'input window, operand 0, single buffered']
    #allocation3 [shape = 's32[1]{0}', space=sflag, size = 0x4, scoped, tag = 'scoped memory for tpu_custom_call.1']
    #allocation4 [shape = 's32[1]{0}', space=sflag, size = 0x4, scoped, tag = 'scoped memory for tpu_custom_call.1']
    #allocation5 [shape = 'u8[2048]{0}', space=vmem, size = 0x800, scoped, tag = 'input window, operand 1, single buffered']
    #allocation6 [shape = 's32[1]{0}', space=sflag, size = 0x4, scoped, tag = 'scoped memory for tpu_custom_call.1']
    #allocation7 [shape = 'u8[4096]{0}', space=vmem, size = 0x1000, scoped, tag = 'input window, operand 2, single buffered']
    #allocation8 [shape = 'u8[16384]{0}', space=vmem, size = 0x4000, scoped, tag = 'input window, operand 3, single buffered']
    #allocation9 [shape = 's32[1]{0}', space=sflag, size = 0x4, scoped, tag = 'scoped memory for tpu_custom_call.1']
    #allocation10 [shape = 'u8[131072]{0}', space=vmem, size = 0x20000, scoped, tag = 'input window, operand 4, single buffered']
    #allocation11 [shape = 'u8[8192]{0}', space=vmem, size = 0x2000, scoped, tag = 'output window, operand 0, single buffered']
    %11 = vsyncpa [#allocation3], 0
    %12 = vsyncpa [#allocation6], 0
    %13 = vsyncpa [#allocation9], 0
    %14 = vsyncpa [#allocation4], 0
    // Predicated region
    $region2: #{tpu_custom_call.1} parent=1 // pred_check
      _
    $region3: #{tpu_custom_call.1} parent=1 // pred_check_branch
      %16 = sbr.rel (0) target = $region5
    $region4: #{tpu_custom_call.1} parent=1 // pred_region
      %s18 = ssub.s32 64, 64
      %19 = vsyncadd [#allocation3], %s18
      %s21 = sshll.u32 [#allocation2], 4
      %s22 = int_to_ptr.vmem [resolvable:$true] %s21
      %24 = dma.hbm_to_vmem [thread:$0]  %s0, 64, %s22, [#allocation3]
    $region5: #{tpu_custom_call.1} parent=1 // pred_fallthru
      _
    // Predicated region
    $region6: #{tpu_custom_call.1} parent=1 // pred_check
      _
    $region7: #{tpu_custom_call.1} parent=1 // pred_check_branch
      %26 = sbr.rel (0) target = $region9
    $region8: #{tpu_custom_call.1} parent=1 // pred_region
      %s28 = ssub.s32 64, 64
      %29 = vsyncadd [#allocation6], %s28
      %s31 = sshll.u32 [#allocation5], 4
      %s32 = int_to_ptr.vmem [resolvable:$true] %s31
      %34 = dma.hbm_to_vmem [thread:$0]  %s1, 64, %s32, [#allocation6]
    $region9: #{tpu_custom_call.1} parent=1 // pred_fallthru
      _
    // Predicated region
    $region10: #{tpu_custom_call.1} parent=1 // pred_check
      _
    $region11: #{tpu_custom_call.1} parent=1 // pred_check_branch
      %36 = sbr.rel (0) target = $region13
    $region12: #{tpu_custom_call.1} parent=1 // pred_region
      %s38 = ssub.s32 128, 128
      %39 = vsyncadd [#allocation6], %s38
      %s41 = sshll.u32 [#allocation7], 4
      %s42 = int_to_ptr.vmem [resolvable:$true] %s41
      %44 = dma.hbm_to_vmem [thread:$0]  %s2, 128, %s42, [#allocation6]
    $region13: #{tpu_custom_call.1} parent=1 // pred_fallthru
      _
    // Predicated region
    $region14: #{tpu_custom_call.1} parent=1 // pred_check
      _
    $region15: #{tpu_custom_call.1} parent=1 // pred_check_branch
      %46 = sbr.rel (0) target = $region17
    $region16: #{tpu_custom_call.1} parent=1 // pred_region
      %s48 = ssub.s32 512, 512
      %49 = vsyncadd [#allocation9], %s48
      %s50 = sshll.u32 [#allocation8], 4
      %s51 = int_to_ptr.vmem [resolvable:$true] %s50
      %56 = dma.hbm_to_vmem [thread:$0]  %s3, 512, %s51, [#allocation9], 256, 256, 16
    $region17: #{tpu_custom_call.1} parent=1 // pred_fallthru
      _
    // Predicated region
    $region18: #{tpu_custom_call.1} parent=1 // pred_check
      _
    $region19: #{tpu_custom_call.1} parent=1 // pred_check_branch
      %58 = sbr.rel (0) target = $region21
    $region20: #{tpu_custom_call.1} parent=1 // pred_region
      %s60 = ssub.s32 4096, 4096
      %61 = vsyncadd [#allocation9], %s60
      %s62 = sshll.u32 [#allocation10], 4
      %s63 = int_to_ptr.vmem [resolvable:$true] %s62
      %68 = dma.hbm_to_vmem [thread:$0]  %s4, 4096, %s63, [#allocation9], 256, 256, 16
    $region21: #{tpu_custom_call.1} parent=1 // pred_fallthru
      _
    // Predicated region
    $region22: #{tpu_custom_call.1} parent=1 // pred_check
      _
    $region23: #{tpu_custom_call.1} parent=1 // pred_check_branch
      %70 = sbr.rel (0) target = $region25
    $region24: #{tpu_custom_call.1} parent=1 // pred_region
      _
    $region25: #{tpu_custom_call.1} parent=1 // pred_fallthru
      _
    // Predicated region
    $region26: #{tpu_custom_call.1} parent=1 // pred_check
      _
    $region27: #{tpu_custom_call.1} parent=1 // pred_check_branch
      %72 = sbr.rel (0) target = $region29
    $region28: #{tpu_custom_call.1} parent=1 // pred_region
      %73 = dma.done [#allocation3], 64
    $region29: #{tpu_custom_call.1} parent=1 // pred_fallthru
      _
    // Predicated region
    $region30: #{tpu_custom_call.1} parent=1 // pred_check
      _
    $region31: #{tpu_custom_call.1} parent=1 // pred_check_branch
      %75 = sbr.rel (0) target = $region33
    $region32: #{tpu_custom_call.1} parent=1 // pred_region
      %76 = dma.done [#allocation6], 64
    $region33: #{tpu_custom_call.1} parent=1 // pred_fallthru
      _
    // Predicated region
    $region34: #{tpu_custom_call.1} parent=1 // pred_check
      _
    $region35: #{tpu_custom_call.1} parent=1 // pred_check_branch
      %78 = sbr.rel (0) target = $region37
    $region36: #{tpu_custom_call.1} parent=1 // pred_region
      %79 = dma.done [#allocation6], 128
    $region37: #{tpu_custom_call.1} parent=1 // pred_fallthru
      _
    // Predicated region
    $region38: #{tpu_custom_call.1} parent=1 // pred_check
      _
    $region39: #{tpu_custom_call.1} parent=1 // pred_check_branch
      %81 = sbr.rel (0) target = $region41
    $region40: #{tpu_custom_call.1} parent=1 // pred_region
      %82 = dma.done [#allocation9], 512
    $region41: #{tpu_custom_call.1} parent=1 // pred_fallthru
      _
    // Predicated region
    $region42: #{tpu_custom_call.1} parent=1 // pred_check
      _
    $region43: #{tpu_custom_call.1} parent=1 // pred_check_branch
      %84 = sbr.rel (0) target = $region45
    $region44: #{tpu_custom_call.1} parent=1 // pred_region
      %85 = dma.done [#allocation9], 4096
    $region45: #{tpu_custom_call.1} parent=1 // pred_fallthru
      _
    %v87 = vld [vmem:[#allocation2] sm:$0xf]
    %v88 = vld [vmem:[#allocation8] sm:$0xff]
    %v89 = vld [vmem:[#allocation8 + $0x8] sm:$0xff]
    %v90 = vld [vmem:[#allocation8 + $0x10] sm:$0xff]
    %v91 = vld [vmem:[#allocation8 + $0x18] sm:$0xff]
    %v92 = vld [vmem:[#allocation5] sm:$0xf]
    %v93 = vld [vmem:[#allocation10] sm:$0xff]
    %v94 = vld [vmem:[#allocation10 + $0x8] sm:$0xff]
    %v95 = vld [vmem:[#allocation10 + $0x10] sm:$0xff]
    %v96 = vld [vmem:[#allocation10 + $0x18] sm:$0xff]
    %v97 = vld [vmem:[#allocation10 + $0x20] sm:$0xff]
    %v98 = vld [vmem:[#allocation10 + $0x28] sm:$0xff]
    %v99 = vld [vmem:[#allocation10 + $0x30] sm:$0xff]
    %v100 = vld [vmem:[#allocation10 + $0x38] sm:$0xff]
    %v101 = vld [vmem:[#allocation10 + $0x40] sm:$0xff]
    %v102 = vld [vmem:[#allocation10 + $0x48] sm:$0xff]
    %v103 = vld [vmem:[#allocation10 + $0x50] sm:$0xff]
    %v104 = vld [vmem:[#allocation10 + $0x58] sm:$0xff]
    %v105 = vld [vmem:[#allocation10 + $0x60] sm:$0xff]
    %v106 = vld [vmem:[#allocation10 + $0x68] sm:$0xff]
    %v107 = vld [vmem:[#allocation10 + $0x70] sm:$0xff]
    %v108 = vld [vmem:[#allocation10 + $0x78] sm:$0xff]
    %v109 = vld [vmem:[#allocation10 + $0x80] sm:$0xff]
    %v110 = vld [vmem:[#allocation10 + $0x88] sm:$0xff]
    %v111 = vld [vmem:[#allocation10 + $0x90] sm:$0xff]
    %v112 = vld [vmem:[#allocation10 + $0x98] sm:$0xff]
    %v113 = vld [vmem:[#allocation10 + $0xa0] sm:$0xff]
    %v114 = vld [vmem:[#allocation10 + $0xa8] sm:$0xff]
    %v115 = vld [vmem:[#allocation10 + $0xb0] sm:$0xff]
    %v116 = vld [vmem:[#allocation10 + $0xb8] sm:$0xff]
    %v117 = vld [vmem:[#allocation10 + $0xc0] sm:$0xff]
    %v118 = vld [vmem:[#allocation10 + $0xc8] sm:$0xff]
    %v119 = vld [vmem:[#allocation10 + $0xd0] sm:$0xff]
    %v120 = vld [vmem:[#allocation10 + $0xd8] sm:$0xff]
    %v121 = vld [vmem:[#allocation10 + $0xe0] sm:$0xff]
    %v122 = vld [vmem:[#allocation10 + $0xe8] sm:$0xff]
    %v123 = vld [vmem:[#allocation10 + $0xf0] sm:$0xff]
    %v124 = vld [vmem:[#allocation10 + $0xf8] sm:$0xff]
    %v157 = vunpack.c.l.b16 %v93
    %v158 = vunpack.c.h.b16 %v93
    %v159 = vunpack.c.l.b16 %v94
    %v160 = vunpack.c.h.b16 %v94
    %v161 = vunpack.c.l.b16 %v95
    %v162 = vunpack.c.h.b16 %v95
    %v163 = vunpack.c.l.b16 %v96
    %v164 = vunpack.c.h.b16 %v96
    %v165 = vunpack.c.l.b16 %v97
    %v166 = vunpack.c.h.b16 %v97
    %v167 = vunpack.c.l.b16 %v98
    %v168 = vunpack.c.h.b16 %v98
    %v169 = vunpack.c.l.b16 %v99
    %v170 = vunpack.c.h.b16 %v99
    %v171 = vunpack.c.l.b16 %v100
    %v172 = vunpack.c.h.b16 %v100
    %v173 = vunpack.c.l.b16 %v101
    %v174 = vunpack.c.h.b16 %v101
    %v175 = vunpack.c.l.b16 %v102
    %v176 = vunpack.c.h.b16 %v102
    %v177 = vunpack.c.l.b16 %v103
    %v178 = vunpack.c.h.b16 %v103
    %v179 = vunpack.c.l.b16 %v104
    %v180 = vunpack.c.h.b16 %v104
    %v181 = vunpack.c.l.b16 %v105
    %v182 = vunpack.c.h.b16 %v105
    %v183 = vunpack.c.l.b16 %v106
    %v184 = vunpack.c.h.b16 %v106
    %v185 = vunpack.c.l.b16 %v107
    %v186 = vunpack.c.h.b16 %v107
    %v187 = vunpack.c.l.b16 %v108
    %v188 = vunpack.c.h.b16 %v108
    %v189 = vunpack.c.l.b16 %v109
    %v190 = vunpack.c.h.b16 %v109
    %v191 = vunpack.c.l.b16 %v110
    %v192 = vunpack.c.h.b16 %v110
    %v193 = vunpack.c.l.b16 %v111
    %v194 = vunpack.c.h.b16 %v111
    %v195 = vunpack.c.l.b16 %v112
    %v196 = vunpack.c.h.b16 %v112
    %v197 = vunpack.c.l.b16 %v113
    %v198 = vunpack.c.h.b16 %v113
    %v199 = vunpack.c.l.b16 %v114
    %v200 = vunpack.c.h.b16 %v114
    %v201 = vunpack.c.l.b16 %v115
    %v202 = vunpack.c.h.b16 %v115
    %v203 = vunpack.c.l.b16 %v116
    %v204 = vunpack.c.h.b16 %v116
    %v205 = vunpack.c.l.b16 %v117
    %v206 = vunpack.c.h.b16 %v117
    %v207 = vunpack.c.l.b16 %v118
    %v208 = vunpack.c.h.b16 %v118
    %v209 = vunpack.c.l.b16 %v119
    %v210 = vunpack.c.h.b16 %v119
    %v211 = vunpack.c.l.b16 %v120
    %v212 = vunpack.c.h.b16 %v120
    %v213 = vunpack.c.l.b16 %v121
    %v214 = vunpack.c.h.b16 %v121
    %v215 = vunpack.c.l.b16 %v122
    %v216 = vunpack.c.h.b16 %v122
    %v217 = vunpack.c.l.b16 %v123
    %v218 = vunpack.c.h.b16 %v123
    %v219 = vunpack.c.l.b16 %v124
    %v220 = vunpack.c.h.b16 %v124
    %v221 = vpack.c.b16 %v161, %v157
    %v222 = vpack.c.b16 %v162, %v158
    %v223 = vpack.c.b16 %v163, %v159
    %v224 = vpack.c.b16 %v164, %v160
    %v225 = vpack.c.b16 %v169, %v165
    %v226 = vpack.c.b16 %v170, %v166
    %v227 = vpack.c.b16 %v171, %v167
    %v228 = vpack.c.b16 %v172, %v168
    %v229 = vpack.c.b16 %v177, %v173
    %v230 = vpack.c.b16 %v178, %v174
    %v231 = vpack.c.b16 %v179, %v175
    %v232 = vpack.c.b16 %v180, %v176
    %v233 = vpack.c.b16 %v185, %v181
    %v234 = vpack.c.b16 %v186, %v182
    %v235 = vpack.c.b16 %v187, %v183
    %v236 = vpack.c.b16 %v188, %v184
    %v237 = vpack.c.b16 %v193, %v189
    %v238 = vpack.c.b16 %v194, %v190
    %v239 = vpack.c.b16 %v195, %v191
    %v240 = vpack.c.b16 %v196, %v192
    %v241 = vpack.c.b16 %v201, %v197
    %v242 = vpack.c.b16 %v202, %v198
    %v243 = vpack.c.b16 %v203, %v199
    %v244 = vpack.c.b16 %v204, %v200
    %v245 = vpack.c.b16 %v209, %v205
    %v246 = vpack.c.b16 %v210, %v206
    %v247 = vpack.c.b16 %v211, %v207
    %v248 = vpack.c.b16 %v212, %v208
    %v249 = vpack.c.b16 %v217, %v213
    %v250 = vpack.c.b16 %v218, %v214
    %v251 = vpack.c.b16 %v219, %v215
    %v252 = vpack.c.b16 %v220, %v216
    %285 = vmatprep.subr.bf16.mxu0 %v222
    %286 = vmatpush1.bf16.msra.mxu0 %v221
    %287 = vmatprep.subr.bf16.mxu0 %v226
    %288 = vmatpush1.bf16.msra.mxu0 %v225
    %289 = vmatprep.subr.bf16.mxu0 %v230
    %290 = vmatpush1.bf16.msra.mxu0 %v229
    %291 = vmatprep.subr.bf16.mxu0 %v234
    %292 = vmatpush1.bf16.msra.mxu0 %v233
    %293 = vmatprep.subr.bf16.mxu0 %v238
    %294 = vmatpush1.bf16.msra.mxu0 %v237
    %295 = vmatprep.subr.bf16.mxu0 %v242
    %296 = vmatpush1.bf16.msra.mxu0 %v241
    %297 = vmatprep.subr.bf16.mxu0 %v246
    %298 = vmatpush1.bf16.msra.mxu0 %v245
    %299 = vmatprep.subr.bf16.mxu0 %v250
    %300 = vmatpush1.bf16.msra.mxu0 %v249
    %301 = vmatprep.subr.bf16.mxu0 0
    %302 = vmatpush1.bf16.msra.mxu0 0
    %303 = vmatprep.subr.bf16.mxu0 0
    %304 = vmatpush1.bf16.msra.mxu0 0
    %305 = vmatprep.subr.bf16.mxu0 0
    %306 = vmatpush1.bf16.msra.mxu0 0
    %307 = vmatprep.subr.bf16.mxu0 0
    %308 = vmatpush1.bf16.msra.mxu0 0
    %309 = vmatprep.subr.bf16.mxu0 0
    %310 = vmatpush1.bf16.msra.mxu0 0
    %311 = vmatprep.subr.bf16.mxu0 0
    %312 = vmatpush1.bf16.msra.mxu0 0
    %313 = vmatprep.subr.bf16.mxu0 0
    %314 = vmatpush1.bf16.msra.mxu0 0
    %315 = vmatprep.subr.bf16.mxu0 0
    %316 = vmatpush1.bf16.msra.mxu0 0
    %317 = vmatprep.mubr.bf16.mxu0 0
    %318 = vmatmul.mubr.bf16.gmra.mrb[0].mxu0 %v92
    %v319 = vpop.f32.mrb[0].mxu0
    %v320 = vadd.f32 0.0, %v319
    %v321 = vpop.f32.mrb[0].mxu0
    %v322 = vadd.f32 0.0, %v321
    %v323 = vpop.f32.mrb[0].mxu0
    %v324 = vpop.f32.mrb[0].mxu0
    %325 = vdwg.mxu0
    %326 = vmatprep.subr.bf16.mxu0 %v224
    %327 = vmatpush1.bf16.msra.mxu0 %v223
    %328 = vmatprep.subr.bf16.mxu0 %v228
    %329 = vmatpush1.bf16.msra.mxu0 %v227
    %330 = vmatprep.subr.bf16.mxu0 %v232
    %331 = vmatpush1.bf16.msra.mxu0 %v231
    %332 = vmatprep.subr.bf16.mxu0 %v236
    %333 = vmatpush1.bf16.msra.mxu0 %v235
    %334 = vmatprep.subr.bf16.mxu0 %v240
    %335 = vmatpush1.bf16.msra.mxu0 %v239
    %336 = vmatprep.subr.bf16.mxu0 %v244
    %337 = vmatpush1.bf16.msra.mxu0 %v243
    %338 = vmatprep.subr.bf16.mxu0 %v248
    %339 = vmatpush1.bf16.msra.mxu0 %v247
    %340 = vmatprep.subr.bf16.mxu0 %v252
    %341 = vmatpush1.bf16.msra.mxu0 %v251
    %342 = vmatprep.subr.bf16.mxu0 0
    %343 = vmatpush1.bf16.msra.mxu0 0
    %344 = vmatprep.subr.bf16.mxu0 0
    %345 = vmatpush1.bf16.msra.mxu0 0
    %346 = vmatprep.subr.bf16.mxu0 0
    %347 = vmatpush1.bf16.msra.mxu0 0
    %348 = vmatprep.subr.bf16.mxu0 0
    %349 = vmatpush1.bf16.msra.mxu0 0
    %350 = vmatprep.subr.bf16.mxu0 0
    %351 = vmatpush1.bf16.msra.mxu0 0
    %352 = vmatprep.subr.bf16.mxu0 0
    %353 = vmatpush1.bf16.msra.mxu0 0
    %354 = vmatprep.subr.bf16.mxu0 0
    %355 = vmatpush1.bf16.msra.mxu0 0
    %356 = vmatprep.subr.bf16.mxu0 0
    %357 = vmatpush1.bf16.msra.mxu0 0
    %358 = vmatprep.mubr.bf16.mxu0 0
    %359 = vmatmul.mubr.bf16.gmra.mrb[0].mxu0 %v92
    %v360 = vpop.f32.mrb[0].mxu0
    %v361 = vadd.f32 0.0, %v360
    %v362 = vpop.f32.mrb[0].mxu0
    %v363 = vadd.f32 0.0, %v362
    %v364 = vpop.f32.mrb[0].mxu0
    %v365 = vpop.f32.mrb[0].mxu0
    %366 = vdwg.mxu0
    %v371 = vunpack.c.l.b16 %v88
    %v372 = vunpack.c.h.b16 %v88
    %v373 = vunpack.c.l.b16 %v89
    %v374 = vunpack.c.h.b16 %v89
    %v375 = vunpack.c.l.b16 %v90
    %v376 = vunpack.c.h.b16 %v90
    %v377 = vunpack.c.l.b16 %v91
    %v378 = vunpack.c.h.b16 %v91
    %v379 = vpack.c.b16 %v375, %v371
    %v380 = vpack.c.b16 %v376, %v372
    %v381 = vpack.c.b16 %v377, %v373
    %v382 = vpack.c.b16 %v378, %v374
    %vm387 = vcmask 130048
    %v389 = vsel %vm387, %v87, 0
    %391 = vmatprep.subr.bf16.mxu0 %v380
    %392 = vmatpush1.bf16.msra.mxu0 %v379
    %393 = vmatprep.subr.bf16.mxu0 0
    %394 = vmatpush1.bf16.msra.mxu0 0
    %395 = vmatprep.subr.bf16.mxu0 0
    %396 = vmatpush1.bf16.msra.mxu0 0
    %397 = vmatprep.subr.bf16.mxu0 0
    %398 = vmatpush1.bf16.msra.mxu0 0
    %399 = vmatprep.subr.bf16.mxu0 0
    %400 = vmatpush1.bf16.msra.mxu0 0
    %401 = vmatprep.subr.bf16.mxu0 0
    %402 = vmatpush1.bf16.msra.mxu0 0
    %403 = vmatprep.subr.bf16.mxu0 0
    %404 = vmatpush1.bf16.msra.mxu0 0
    %405 = vmatprep.subr.bf16.mxu0 0
    %406 = vmatpush1.bf16.msra.mxu0 0
    %407 = vmatprep.subr.bf16.mxu0 0
    %408 = vmatpush1.bf16.msra.mxu0 0
    %409 = vmatprep.subr.bf16.mxu0 0
    %410 = vmatpush1.bf16.msra.mxu0 0
    %411 = vmatprep.subr.bf16.mxu0 0
    %412 = vmatpush1.bf16.msra.mxu0 0
    %413 = vmatprep.subr.bf16.mxu0 0
    %414 = vmatpush1.bf16.msra.mxu0 0
    %415 = vmatprep.subr.bf16.mxu0 0
    %416 = vmatpush1.bf16.msra.mxu0 0
    %417 = vmatprep.subr.bf16.mxu0 0
    %418 = vmatpush1.bf16.msra.mxu0 0
    %419 = vmatprep.subr.bf16.mxu0 0
    %420 = vmatpush1.bf16.msra.mxu0 0
    %421 = vmatprep.subr.bf16.mxu0 0
    %422 = vmatpush1.bf16.msra.mxu0 0
    %423 = vmatprep.mubr.bf16.mxu0 0
    %424 = vmatmul.mubr.bf16.gmra.mrb[0].mxu0 %v389
    %v425 = vpop.f32.mrb[0].mxu0
    %v426 = vadd.f32 %v320, %v425
    %v427 = vpop.f32.mrb[0].mxu0
    %v428 = vadd.f32 %v322, %v427
    %v429 = vpop.f32.mrb[0].mxu0
    %v430 = vpop.f32.mrb[0].mxu0
    %431 = vdwg.mxu0
    %432 = vmatprep.subr.bf16.mxu0 %v382
    %433 = vmatpush1.bf16.msra.mxu0 %v381
    %434 = vmatprep.subr.bf16.mxu0 0
    %435 = vmatpush1.bf16.msra.mxu0 0
    %436 = vmatprep.subr.bf16.mxu0 0
    %437 = vmatpush1.bf16.msra.mxu0 0
    %438 = vmatprep.subr.bf16.mxu0 0
    %439 = vmatpush1.bf16.msra.mxu0 0
    %440 = vmatprep.subr.bf16.mxu0 0
    %441 = vmatpush1.bf16.msra.mxu0 0
    %442 = vmatprep.subr.bf16.mxu0 0
    %443 = vmatpush1.bf16.msra.mxu0 0
    %444 = vmatprep.subr.bf16.mxu0 0
    %445 = vmatpush1.bf16.msra.mxu0 0
    %446 = vmatprep.subr.bf16.mxu0 0
    %447 = vmatpush1.bf16.msra.mxu0 0
    %448 = vmatprep.subr.bf16.mxu0 0
    %449 = vmatpush1.bf16.msra.mxu0 0
    %450 = vmatprep.subr.bf16.mxu0 0
    %451 = vmatpush1.bf16.msra.mxu0 0
    %452 = vmatprep.subr.bf16.mxu0 0
    %453 = vmatpush1.bf16.msra.mxu0 0
    %454 = vmatprep.subr.bf16.mxu0 0
    %455 = vmatpush1.bf16.msra.mxu0 0
    %456 = vmatprep.subr.bf16.mxu0 0
    %457 = vmatpush1.bf16.msra.mxu0 0
    %458 = vmatprep.subr.bf16.mxu0 0
    %459 = vmatpush1.bf16.msra.mxu0 0
    %460 = vmatprep.subr.bf16.mxu0 0
    %461 = vmatpush1.bf16.msra.mxu0 0
    %462 = vmatprep.subr.bf16.mxu0 0
    %463 = vmatpush1.bf16.msra.mxu0 0
    %464 = vmatprep.mubr.bf16.mxu0 0
    %465 = vmatmul.mubr.bf16.gmra.mrb[0].mxu0 %v389
    %v466 = vpop.f32.mrb[0].mxu0
    %v467 = vadd.f32 %v361, %v466
    %v468 = vpop.f32.mrb[0].mxu0
    %v469 = vadd.f32 %v363, %v468
    %v470 = vpop.f32.mrb[0].mxu0
    %v471 = vpop.f32.mrb[0].mxu0
    %472 = vdwg.mxu0
    %v473 = vld [vmem:[%s5] sm:$0xf]
    %v475 = vlaneseq
    %v476 = vshrl.u32 %v475, 7
    %v477 = vsub.s32 0, %v476
    %v478 = vrot.slane %v473, %v477
    %v479 = vlaneseq
    %v480 = vshrl.u32 %v479, 7
    %v481 = vsub.s32 1, %v480
    %v482 = vrot.slane %v473, %v481
    %v483 = vlaneseq
    %v484 = vshrl.u32 %v483, 7
    %v485 = vsub.s32 2, %v484
    %v486 = vrot.slane %v473, %v485
    %v487 = vlaneseq
    %v488 = vshrl.u32 %v487, 7
    %v489 = vsub.s32 3, %v488
    %v490 = vrot.slane %v473, %v489
    %v495 = vadd.f32 %v426, %v478
    %v496 = vadd.f32 %v428, %v482
    %v497 = vadd.f32 %v467, %v486
    %v498 = vadd.f32 %v469, %v490
    %v499 = vtanh.pop %v495
    %v500 = vxor.u32 %v496, 2147483648
    %v501 = vmul.f32 %v500, 1.442695
    %v502 = vpow.pop %v501
    %v503 = vadd.f32 %v502, 1.0
    %v504 = vrcp.pop %v503
    %v505 = vmul.f32 1.0, %v504
    %v506 = vxor.u32 %v497, 2147483648
    %v507 = vmul.f32 %v506, 1.442695
    %v508 = vpow.pop %v507
    %v509 = vadd.f32 %v508, 1.0
    %v510 = vrcp.pop %v509
    %v511 = vmul.f32 1.0, %v510
    %v512 = vxor.u32 %v498, 2147483648
    %v513 = vmul.f32 %v512, 1.442695
    %v514 = vpow.pop %v513
    %v515 = vadd.f32 %v514, 1.0
    %v516 = vrcp.pop %v515
    %v517 = vmul.f32 1.0, %v516
    %v518 = vld [vmem:[#allocation7] sm:$0xff]
    %v519 = vmul.f32 %v505, %v518
    %v520 = vmul.f32 %v511, %v499
    %v521 = vadd.f32 %v519, %v520
    %v522 = vtanh.pop %v521
    %v523 = vmul.f32 %v517, %v522
    %524 = vst [vmem:[#allocation11] sm:$0xff] %v523
    %525 = vst [vmem:[#allocation11 + $0x8] sm:$0xff] %v521
    // Predicated region
    $region46: #{tpu_custom_call.1} parent=1 // pred_check
      _
    $region47: #{tpu_custom_call.1} parent=1 // pred_check_branch
      %527 = sbr.rel (0) target = $region49
    $region48: #{tpu_custom_call.1} parent=1 // pred_region
      %s529 = ssub.s32 256, 256
      %530 = vsyncadd [#allocation4], %s529
      %s532 = sshll.u32 [#allocation11], 4
      %s533 = int_to_ptr.vmem [resolvable:$true] %s532
      %535 = dma.vmem_to_hbm [thread:$0]  %s533, 256, %s6, [#allocation4]
    $region49: #{tpu_custom_call.1} parent=1 // pred_fallthru
      _
    // Predicated region
    $region50: #{tpu_custom_call.1} parent=1 // pred_check
      _
    $region51: #{tpu_custom_call.1} parent=1 // pred_check_branch
      %537 = sbr.rel (0) target = $region53
    $region52: #{tpu_custom_call.1} parent=1 // pred_region
      %538 = dma.done [#allocation4], 256
    $region53: #{tpu_custom_call.1} parent=1 // pred_fallthru
      _
    %539 = vsyncpa [#allocation3], 1
    %540 = vsyncpa [#allocation6], 1
    %541 = vsyncpa [#allocation9], 1
    %542 = vsyncpa [#allocation4], 1

</llo_original>
